<compile_context>
chip_gen: v5e
topology: v5e:2x2
jax: 0.10.0
libtpu: 0.0.40
codegen_flags: <defaults>
</compile_context>

<pallas_src>
import functools

import jax
import jax.numpy as jnp
from jax.experimental import pallas as pl
from jax.experimental.pallas import tpu as pltpu

LANE = 128
SUBLANE = 8

# Flipped to False (once) if this JAX build rejects pipeline_mode=pl.Buffered(1).
_WEIGHT_SINGLE_BUFFER_OK = True


def _round_up(x, m):
    return ((x + m - 1) // m) * m


def _cdiv(a, b):
    return (a + b - 1) // b


# ----------------------------------------------------------------------------
# Fused Pallas kernel: all Linear(+sigmoid) layers in one kernel body.
# refs = (w0, b0, w1, b1, ..., w_{L-1}, b_{L-1}, o_ref)
# ----------------------------------------------------------------------------
def _fused_mlp_kernel(x_ref, *refs, num_layers, sigmoid_last, compute_dtype):
    o_ref = refs[-1]
    # Weights are pre-cast to compute_dtype; cast the input tile once.
    act_mm = x_ref[...].astype(compute_dtype)
    out_f32 = None
    for l in range(num_layers):
        w = refs[2 * l][...]                       # (din[_pad], dout_pad)
        b = refs[2 * l + 1][...]                   # (1, dout_pad) f32
        acc = jnp.dot(act_mm, w, preferred_element_type=jnp.float32) + b
        if l < num_layers - 1 or sigmoid_last:
            acc = jax.nn.sigmoid(acc)              # f32 sigmoid -> EUP slot
        out_f32 = acc
        if l < num_layers - 1:
            # single per-layer cast; activations stay in compute_dtype between
            # layers (padded lanes are 0.5 but the next layer's padded weight
            # ROWS are exactly zero, so they are mathematically inert).
            act_mm = acc.astype(compute_dtype)
    # lane-dense store: full padded accumulator, no masked vst.msk
    o_ref[...] = out_f32.astype(o_ref.dtype)


# ----------------------------------------------------------------------------
# Parameter init (PyTorch convention: W (out,in) xavier_uniform, b zeros).
# ----------------------------------------------------------------------------
def mlp_ltr_init(key, dimensions):
    dims_model = list(dimensions) + [1]
    params = []
    for i in range(len(dims_model) - 1):
        fan_in, fan_out = dims_model[i], dims_model[i + 1]
        key, wk = jax.random.split(key)
        limit = (6.0 / (fan_in + fan_out)) ** 0.5
        W = jax.random.uniform(wk, (fan_out, fan_in), jnp.float32, -limit, limit)
        b = jnp.zeros((fan_out,), jnp.float32)
        params.append((W, b))
    return params


# ----------------------------------------------------------------------------
# One-time parameter preparation: transpose to (in, out), zero-pad the HIDDEN
# feature dims to multiples of 128 (lane-dense matmuls).  The FIRST layer's
# input dim stays unpadded so x is streamed from HBM at its real width.
# Weights are pre-cast to the matmul compute dtype (bf16 by default — v5e/v6e/
# v7x MXUs are bf16-native); biases stay f32 (added to the f32 accumulator).
# ----------------------------------------------------------------------------
def mlp_ltr_prepare(params, compute_dtype=jnp.bfloat16):
    weights, biases, out_dims, out_dims_pad = [], [], [], []
    for idx, (W, b) in enumerate(params):
        dout, din = W.shape
        din_p = din if idx == 0 else _round_up(din, LANE)
        dout_p = _round_up(dout, LANE)
        Wt = jnp.zeros((din_p, dout_p), compute_dtype)
        Wt = Wt.at[:din, :dout].set(W.T.astype(compute_dtype))
        bp = jnp.zeros((1, dout_p), jnp.float32).at[0, :dout].set(
            b.astype(jnp.float32))
        weights.append(Wt)
        biases.append(bp)
        out_dims.append(dout)
        out_dims_pad.append(dout_p)
    return {
        "weights": weights,
        "biases": biases,
        "out_dims": out_dims,
        "out_dims_pad": out_dims_pad,
        "in_dim": params[0][0].shape[1],
        "compute_dtype": compute_dtype,
    }


# ----------------------------------------------------------------------------
# Fused forward pass.
# ----------------------------------------------------------------------------
def mlp_ltr_forward(prepared, x, return_one_to_the_last_layer=False,
                    tile_b=512):
    global _WEIGHT_SINGLE_BUFFER_OK

    B, Din = x.shape
    assert Din == prepared["in_dim"], "input feature dim mismatch"

    weights = prepared["weights"]
    biases = prepared["biases"]
    out_dims = prepared["out_dims"]
    out_dims_pad = prepared["out_dims_pad"]
    compute_dtype = prepared["compute_dtype"]

    if return_one_to_the_last_layer:
        weights, biases = weights[:-1], biases[:-1]
        out_dims, out_dims_pad = out_dims[:-1], out_dims_pad[:-1]
        sigmoid_last = True
    else:
        sigmoid_last = False
    num_layers = len(weights)
    if num_layers == 0:           # degenerate: single-layer model, penult requested
        return x
    out_cols, out_pad = out_dims[-1], out_dims_pad[-1]

    # --- batch tiling (multiple of the f32 sublane) --------------------------
    tile_b_eff = min(_round_up(tile_b, SUBLANE), _round_up(B, SUBLANE))
    # v7x has 2 TensorCores: make sure the grid has >= 2 steps when possible.
    if _cdiv(B, tile_b_eff) < 2 and tile_b_eff > SUBLANE:
        tile_b_eff = _round_up(_cdiv(B, 2), SUBLANE)
    n_steps = _cdiv(B, tile_b_eff)
    B_pad = tile_b_eff * n_steps

    if B_pad == B:
        x_in = x                                   # fast path: no copy at all
    else:                                          # ragged batch only
        x_in = jnp.zeros((B_pad, Din), x.dtype).at[:B].set(x)

    flat_args = [x_in]
    for Wt, bp in zip(weights, biases):
        flat_args += [Wt, bp]

    # advisory cost estimate
    n_sig = num_layers if sigmoid_last else num_layers - 1
    flops = 2 * B_pad * sum(int(w.shape[0]) * int(w.shape[1]) for w in weights)
    transcendentals = B_pad * sum(int(w.shape[1]) for w in weights[:n_sig])
    bytes_accessed = (
        B_pad * Din * x.dtype.itemsize
        + sum(w.size * w.dtype.itemsize for w in weights)
        + sum(b.size * b.dtype.itemsize for b in biases)
        + B_pad * out_pad * jnp.dtype(x.dtype).itemsize
    )

    kernel = functools.partial(
        _fused_mlp_kernel,
        num_layers=num_layers,
        sigmoid_last=sigmoid_last,
        compute_dtype=compute_dtype,
    )

    def run(single_buffer_weights):
        def resident_spec(shape):
            # Constant index_map -> block is VMEM-resident for the whole grid.
            # Buffered(1): no point double-buffering a block that never changes
            # (halves resident-weight VMEM; matters for v7x's 64 MiB).
            if single_buffer_weights:
                return pl.BlockSpec(shape, lambda i: (0, 0),
                                    pipeline_mode=pl.Buffered(1))
            return pl.BlockSpec(shape, lambda i: (0, 0))

        in_specs = [pl.BlockSpec((tile_b_eff, Din), lambda i: (i, 0))]
        for Wt, bp in zip(weights, biases):
            in_specs.append(resident_spec(Wt.shape))
            in_specs.append(resident_spec(bp.shape))

        return pl.pallas_call(
            kernel,
            out_shape=jax.ShapeDtypeStruct((B_pad, out_pad), x.dtype),
            grid_spec=pltpu.PrefetchScalarGridSpec(
                num_scalar_prefetch=0,
                grid=(n_steps,),
                in_specs=in_specs,
                out_specs=pl.BlockSpec((tile_b_eff, out_pad), lambda i: (i, 0)),
            ),
            compiler_params=pltpu.CompilerParams(
                dimension_semantics=("parallel",),
                # defaults are ample here; set vmem_limit_bytes explicitly if
                # hidden dims grow beyond a few hundred on v7x (64 MiB VMEM).
            ),
            cost_estimate=pl.CostEstimate(
                flops=int(flops),
                transcendentals=int(transcendentals),
                bytes_accessed=int(bytes_accessed),
            ),
        )(*flat_args)

    if _WEIGHT_SINGLE_BUFFER_OK:
        try:
            out = run(True)
        except Exception:
            # graceful fallback if this JAX build rejects pipeline_mode=Buffered(1)
            _WEIGHT_SINGLE_BUFFER_OK = False
            out = run(False)
    else:
        out = run(False)

    if B_pad != B:
        out = out[:B]
    if out_pad != out_cols:
        out = out[:, :out_cols]
    return out


# ----------------------------------------------------------------------------
# Pure-JAX reference.
# ----------------------------------------------------------------------------
def mlp_ltr_reference(params, x, return_one_to_the_last_layer=False):
    out = x
    for W, b in params[:-1]:
        out = jax.nn.sigmoid(out @ W.T + b)
    if return_one_to_the_last_layer:
        return out
    W, b = params[-1]
    return out @ W.T + b


if __name__ == "__main__":
    key = jax.random.PRNGKey(0)

    # dimensions = [32, 64, 16] -> layers: 32->64, 64->16, 16->1
    dimensions = [32, 64, 16]
    batch = 16

    pkey, xkey = jax.random.split(key)
    params = mlp_ltr_init(pkey, dimensions)
    x = jax.random.normal(xkey, (batch, dimensions[0]), dtype=jnp.float32)

    y_ref = mlp_ltr_reference(params, x)
    penult_ref = mlp_ltr_reference(params, x, return_one_to_the_last_layer=True)

    # ---- exact-precision path (f32 weights in the MXU) ----------------------
    prepared_f32 = mlp_ltr_prepare(params, compute_dtype=jnp.float32)
    y = jax.block_until_ready(mlp_ltr_forward(prepared_f32, x))
    penult = jax.block_until_ready(
        mlp_ltr_forward(prepared_f32, x, return_one_to_the_last_layer=True))

    assert y.shape == (batch, 1)
    assert penult.shape == (batch, dimensions[-1])
    assert jnp.allclose(y, y_ref, atol=1e-5, rtol=1e-5), "final-layer mismatch"
    assert jnp.allclose(penult, penult_ref, atol=1e-5, rtol=1e-5), \
        "penultimate-layer mismatch"

    # ---- ragged batch (not a multiple of the tile) exercises the padding path
    x2 = jax.random.normal(jax.random.PRNGKey(1), (37, dimensions[0]),
                           dtype=jnp.float32)
    y2 = jax.block_until_ready(mlp_ltr_forward(prepared_f32, x2, tile_b=32))
    assert y2.shape == (37, 1)
    assert jnp.allclose(y2, mlp_ltr_reference(params, x2),
                        atol=1e-5, rtol=1e-5), "ragged-batch mismatch"

    # ---- default bf16 path (v5e/v6e/v7x MXU-native), checked vs reference ---
    prepared = mlp_ltr_prepare(params)             # bf16 weights by default
    y_bf16 = jax.block_until_ready(mlp_ltr_forward(prepared, x))
    p_bf16 = jax.block_until_ready(
        mlp_ltr_forward(prepared, x, return_one_to_the_last_layer=True))
    assert y_bf16.shape == (batch, 1)
    assert p_bf16.shape == (batch, dimensions[-1])
    assert bool(jnp.all(jnp.isfinite(y_bf16)))
    assert jnp.allclose(y_bf16, y_ref, atol=1e-1, rtol=5e-2), \
        "bf16 final-layer drift too large"
    assert jnp.allclose(p_bf16, penult_ref, atol=5e-2, rtol=5e-2), \
        "bf16 penultimate-layer drift too large"

    print("KERNEL_OK")
</pallas_src>

<mosaic_0001>
module attributes {stable_mosaic.version = 11 : i64} {
  func.func @_fused_mlp_kernel(%arg0: i32, %arg1: memref<8x32xf32, #tpu.memory_space<vmem>>, %arg2: memref<32x128xf32, #tpu.memory_space<vmem>>, %arg3: memref<1x128xf32, #tpu.memory_space<vmem>>, %arg4: memref<128x128xf32, #tpu.memory_space<vmem>>, %arg5: memref<1x128xf32, #tpu.memory_space<vmem>>, %arg6: memref<128x128xf32, #tpu.memory_space<vmem>>, %arg7: memref<1x128xf32, #tpu.memory_space<vmem>>, %arg8: memref<8x128xf32, #tpu.memory_space<vmem>>) attributes {dimension_semantics = [#tpu.dimension_semantics<parallel>], iteration_bounds = array<i64: 2>, scalar_prefetch = 0 : i64, scratch_operands = 0 : i64, tpu.core_type = #tpu.core_type<tc>, window_params = [{transform_indices = @transform_0, window_bounds = array<i64: 8, 32>}, {pipeline_mode = #tpu.pipeline_mode<synchronous>, transform_indices = @transform_1, window_bounds = array<i64: 32, 128>}, {pipeline_mode = #tpu.pipeline_mode<synchronous>, transform_indices = @transform_2, window_bounds = array<i64: 1, 128>}, {pipeline_mode = #tpu.pipeline_mode<synchronous>, transform_indices = @transform_3, window_bounds = array<i64: 128, 128>}, {pipeline_mode = #tpu.pipeline_mode<synchronous>, transform_indices = @transform_4, window_bounds = array<i64: 1, 128>}, {pipeline_mode = #tpu.pipeline_mode<synchronous>, transform_indices = @transform_5, window_bounds = array<i64: 128, 128>}, {pipeline_mode = #tpu.pipeline_mode<synchronous>, transform_indices = @transform_6, window_bounds = array<i64: 1, 128>}, {transform_indices = @transform_7, window_bounds = array<i64: 8, 128>}]} {
    %c0 = arith.constant 0 : index
    %c0_0 = arith.constant 0 : index
    %0 = vector.load %arg1[%c0, %c0_0] : memref<8x32xf32, #tpu.memory_space<vmem>>, vector<8x32xf32>
    %c0_1 = arith.constant 0 : index
    %c0_2 = arith.constant 0 : index
    %1 = vector.load %arg2[%c0_1, %c0_2] : memref<32x128xf32, #tpu.memory_space<vmem>>, vector<32x128xf32>
    %c0_3 = arith.constant 0 : index
    %c0_4 = arith.constant 0 : index
    %2 = vector.load %arg3[%c0_3, %c0_4] : memref<1x128xf32, #tpu.memory_space<vmem>>, vector<1x128xf32>
    %cst = arith.constant dense<0.000000e+00> : vector<8x128xf32>
    %3 = tpu.matmul %0, %1, %cst {dimension_numbers = #tpu.dot_dimension_numbers<[1], [0], [0], [1], [0, 0, 1, 1], [], []>} : vector<8x32xf32>, vector<32x128xf32>, vector<8x128xf32> -> vector<8x128xf32>
    %4 = vector.broadcast %2 : vector<1x128xf32> to vector<8x128xf32>
    %5 = arith.addf %3, %4 : vector<8x128xf32>
    %6 = arith.negf %5 : vector<8x128xf32>
    %7 = math.exp %6 : vector<8x128xf32>
    %cst_5 = arith.constant 1.000000e+00 : f32
    %8 = vector.broadcast %cst_5 : f32 to vector<8x128xf32>
    %9 = arith.addf %8, %7 : vector<8x128xf32>
    %10 = arith.divf %8, %9 : vector<8x128xf32>
    %c0_6 = arith.constant 0 : index
    %c0_7 = arith.constant 0 : index
    %11 = vector.load %arg4[%c0_6, %c0_7] : memref<128x128xf32, #tpu.memory_space<vmem>>, vector<128x128xf32>
    %c0_8 = arith.constant 0 : index
    %c0_9 = arith.constant 0 : index
    %12 = vector.load %arg5[%c0_8, %c0_9] : memref<1x128xf32, #tpu.memory_space<vmem>>, vector<1x128xf32>
    %cst_10 = arith.constant dense<0.000000e+00> : vector<8x128xf32>
    %13 = tpu.matmul %10, %11, %cst_10 {dimension_numbers = #tpu.dot_dimension_numbers<[1], [0], [0], [1], [0, 0, 1, 1], [], []>} : vector<8x128xf32>, vector<128x128xf32>, vector<8x128xf32> -> vector<8x128xf32>
    %14 = vector.broadcast %12 : vector<1x128xf32> to vector<8x128xf32>
    %15 = arith.addf %13, %14 : vector<8x128xf32>
    %16 = arith.negf %15 : vector<8x128xf32>
    %17 = math.exp %16 : vector<8x128xf32>
    %cst_11 = arith.constant 1.000000e+00 : f32
    %18 = vector.broadcast %cst_11 : f32 to vector<8x128xf32>
    %19 = arith.addf %18, %17 : vector<8x128xf32>
    %20 = arith.divf %18, %19 : vector<8x128xf32>
    %c0_12 = arith.constant 0 : index
    %c0_13 = arith.constant 0 : index
    %21 = vector.load %arg6[%c0_12, %c0_13] : memref<128x128xf32, #tpu.memory_space<vmem>>, vector<128x128xf32>
    %c0_14 = arith.constant 0 : index
    %c0_15 = arith.constant 0 : index
    %22 = vector.load %arg7[%c0_14, %c0_15] : memref<1x128xf32, #tpu.memory_space<vmem>>, vector<1x128xf32>
    %cst_16 = arith.constant dense<0.000000e+00> : vector<8x128xf32>
    %23 = tpu.matmul %20, %21, %cst_16 {dimension_numbers = #tpu.dot_dimension_numbers<[1], [0], [0], [1], [0, 0, 1, 1], [], []>} : vector<8x128xf32>, vector<128x128xf32>, vector<8x128xf32> -> vector<8x128xf32>
    %24 = vector.broadcast %22 : vector<1x128xf32> to vector<8x128xf32>
    %25 = arith.addf %23, %24 : vector<8x128xf32>
    %c0_17 = arith.constant 0 : index
    %c0_18 = arith.constant 0 : index
    %26 = vector.load %arg8[%c0_17, %c0_18] : memref<8x128xf32, #tpu.memory_space<vmem>>, vector<8x128xf32>
    tpu.vector_store %arg8[%c0_17, %c0_18], %25 {strides = array<i32>} : memref<8x128xf32, #tpu.memory_space<vmem>>, vector<8x128xf32>,
    return
  }
  func.func @transform_0(%arg0: i32) -> (i32, i32) {
    %c0_i32 = arith.constant 0 : i32
    %c0_i32_0 = arith.constant 0 : i32
    return %arg0, %c0_i32 : i32, i32
  }
  func.func @transform_1(%arg0: i32) -> (i32, i32) {
    %c0_i32 = arith.constant 0 : i32
    %c0_i32_0 = arith.constant 0 : i32
    %c0_i32_1 = arith.constant 0 : i32
    return %c0_i32, %c0_i32_0 : i32, i32
  }
  func.func @transform_2(%arg0: i32) -> (i32, i32) {
    %c0_i32 = arith.constant 0 : i32
    %c0_i32_0 = arith.constant 0 : i32
    %c0_i32_1 = arith.constant 0 : i32
    return %c0_i32, %c0_i32_0 : i32, i32
  }
  func.func @transform_3(%arg0: i32) -> (i32, i32) {
    %c0_i32 = arith.constant 0 : i32
    %c0_i32_0 = arith.constant 0 : i32
    %c0_i32_1 = arith.constant 0 : i32
    return %c0_i32, %c0_i32_0 : i32, i32
  }
  func.func @transform_4(%arg0: i32) -> (i32, i32) {
    %c0_i32 = arith.constant 0 : i32
    %c0_i32_0 = arith.constant 0 : i32
    %c0_i32_1 = arith.constant 0 : i32
    return %c0_i32, %c0_i32_0 : i32, i32
  }
  func.func @transform_5(%arg0: i32) -> (i32, i32) {
    %c0_i32 = arith.constant 0 : i32
    %c0_i32_0 = arith.constant 0 : i32
    %c0_i32_1 = arith.constant 0 : i32
    return %c0_i32, %c0_i32_0 : i32, i32
  }
  func.func @transform_6(%arg0: i32) -> (i32, i32) {
    %c0_i32 = arith.constant 0 : i32
    %c0_i32_0 = arith.constant 0 : i32
    %c0_i32_1 = arith.constant 0 : i32
    return %c0_i32, %c0_i32_0 : i32, i32
  }
  func.func @transform_7(%arg0: i32) -> (i32, i32) {
    %c0_i32 = arith.constant 0 : i32
    %c0_i32_0 = arith.constant 0 : i32
    return %arg0, %c0_i32 : i32, i32
  }
}

module attributes {stable_mosaic.version = 11 : i64} {
  func.func @_fused_mlp_kernel(%arg0: i32, %arg1: memref<8x32xf32, #tpu.memory_space<vmem>>, %arg2: memref<32x128xf32, #tpu.memory_space<vmem>>, %arg3: memref<1x128xf32, #tpu.memory_space<vmem>>, %arg4: memref<128x128xf32, #tpu.memory_space<vmem>>, %arg5: memref<1x128xf32, #tpu.memory_space<vmem>>, %arg6: memref<128x128xf32, #tpu.memory_space<vmem>>, %arg7: memref<1x128xf32, #tpu.memory_space<vmem>>, %arg8: memref<8x128xf32, #tpu.memory_space<vmem>>) attributes {dimension_semantics = [#tpu.dimension_semantics<parallel>], iteration_bounds = array<i64: 2>, scalar_prefetch = 0 : i64, scratch_operands = 0 : i64, tpu.core_type = #tpu.core_type<tc>, window_params = [{transform_indices = @transform_0, window_bounds = array<i64: 8, 32>}, {pipeline_mode = #tpu.pipeline_mode<synchronous>, transform_indices = @transform_1, window_bounds = array<i64: 32, 128>}, {pipeline_mode = #tpu.pipeline_mode<synchronous>, transform_indices = @transform_2, window_bounds = array<i64: 1, 128>}, {pipeline_mode = #tpu.pipeline_mode<synchronous>, transform_indices = @transform_3, window_bounds = array<i64: 128, 128>}, {pipeline_mode = #tpu.pipeline_mode<synchronous>, transform_indices = @transform_4, window_bounds = array<i64: 1, 128>}, {pipeline_mode = #tpu.pipeline_mode<synchronous>, transform_indices = @transform_5, window_bounds = array<i64: 128, 128>}, {pipeline_mode = #tpu.pipeline_mode<synchronous>, transform_indices = @transform_6, window_bounds = array<i64: 1, 128>}, {transform_indices = @transform_7, window_bounds = array<i64: 8, 128>}]} {
    %c0 = arith.constant 0 : index
    %c0_0 = arith.constant 0 : index
    %0 = vector.load %arg1[%c0, %c0_0] : memref<8x32xf32, #tpu.memory_space<vmem>>, vector<8x32xf32>
    %c0_1 = arith.constant 0 : index
    %c0_2 = arith.constant 0 : index
    %1 = vector.load %arg2[%c0_1, %c0_2] : memref<32x128xf32, #tpu.memory_space<vmem>>, vector<32x128xf32>
    %c0_3 = arith.constant 0 : index
    %c0_4 = arith.constant 0 : index
    %2 = vector.load %arg3[%c0_3, %c0_4] : memref<1x128xf32, #tpu.memory_space<vmem>>, vector<1x128xf32>
    %cst = arith.constant dense<0.000000e+00> : vector<8x128xf32>
    %3 = tpu.matmul %0, %1, %cst {dimension_numbers = #tpu.dot_dimension_numbers<[1], [0], [0], [1], [0, 0, 1, 1], [], []>} : vector<8x32xf32>, vector<32x128xf32>, vector<8x128xf32> -> vector<8x128xf32>
    %4 = vector.broadcast %2 : vector<1x128xf32> to vector<8x128xf32>
    %5 = arith.addf %3, %4 : vector<8x128xf32>
    %6 = arith.negf %5 : vector<8x128xf32>
    %7 = math.exp %6 : vector<8x128xf32>
    %cst_5 = arith.constant 1.000000e+00 : f32
    %8 = vector.broadcast %cst_5 : f32 to vector<8x128xf32>
    %9 = arith.addf %8, %7 : vector<8x128xf32>
    %10 = arith.divf %8, %9 : vector<8x128xf32>
    %c0_6 = arith.constant 0 : index
    %c0_7 = arith.constant 0 : index
    %11 = vector.load %arg4[%c0_6, %c0_7] : memref<128x128xf32, #tpu.memory_space<vmem>>, vector<128x128xf32>
    %c0_8 = arith.constant 0 : index
    %c0_9 = arith.constant 0 : index
    %12 = vector.load %arg5[%c0_8, %c0_9] : memref<1x128xf32, #tpu.memory_space<vmem>>, vector<1x128xf32>
    %cst_10 = arith.constant dense<0.000000e+00> : vector<8x128xf32>
    %13 = tpu.matmul %10, %11, %cst_10 {dimension_numbers = #tpu.dot_dimension_numbers<[1], [0], [0], [1], [0, 0, 1, 1], [], []>} : vector<8x128xf32>, vector<128x128xf32>, vector<8x128xf32> -> vector<8x128xf32>
    %14 = vector.broadcast %12 : vector<1x128xf32> to vector<8x128xf32>
    %15 = arith.addf %13, %14 : vector<8x128xf32>
    %16 = arith.negf %15 : vector<8x128xf32>
    %17 = math.exp %16 : vector<8x128xf32>
    %cst_11 = arith.constant 1.000000e+00 : f32
    %18 = vector.broadcast %cst_11 : f32 to vector<8x128xf32>
    %19 = arith.addf %18, %17 : vector<8x128xf32>
    %20 = arith.divf %18, %19 : vector<8x128xf32>
    %c0_12 = arith.constant 0 : index
    %c0_13 = arith.constant 0 : index
    %21 = vector.load %arg6[%c0_12, %c0_13] : memref<128x128xf32, #tpu.memory_space<vmem>>, vector<128x128xf32>
    %c0_14 = arith.constant 0 : index
    %c0_15 = arith.constant 0 : index
    %22 = vector.load %arg7[%c0_14, %c0_15] : memref<1x128xf32, #tpu.memory_space<vmem>>, vector<1x128xf32>
    %cst_16 = arith.constant dense<0.000000e+00> : vector<8x128xf32>
    %23 = tpu.matmul %20, %21, %cst_16 {dimension_numbers = #tpu.dot_dimension_numbers<[1], [0], [0], [1], [0, 0, 1, 1], [], []>} : vector<8x128xf32>, vector<128x128xf32>, vector<8x128xf32> -> vector<8x128xf32>
    %24 = vector.broadcast %22 : vector<1x128xf32> to vector<8x128xf32>
    %25 = arith.addf %23, %24 : vector<8x128xf32>
    %c0_17 = arith.constant 0 : index
    %c0_18 = arith.constant 0 : index
    %26 = vector.load %arg8[%c0_17, %c0_18] : memref<8x128xf32, #tpu.memory_space<vmem>>, vector<8x128xf32>
    tpu.vector_store %arg8[%c0_17, %c0_18], %25 {strides = array<i32>} : memref<8x128xf32, #tpu.memory_space<vmem>>, vector<8x128xf32>,
    return
  }
  func.func @transform_0(%arg0: i32) -> (i32, i32) {
    %c0_i32 = arith.constant 0 : i32
    %c0_i32_0 = arith.constant 0 : i32
    return %arg0, %c0_i32 : i32, i32
  }
  func.func @transform_1(%arg0: i32) -> (i32, i32) {
    %c0_i32 = arith.constant 0 : i32
    %c0_i32_0 = arith.constant 0 : i32
    %c0_i32_1 = arith.constant 0 : i32
    return %c0_i32, %c0_i32_0 : i32, i32
  }
  func.func @transform_2(%arg0: i32) -> (i32, i32) {
    %c0_i32 = arith.constant 0 : i32
    %c0_i32_0 = arith.constant 0 : i32
    %c0_i32_1 = arith.constant 0 : i32
    return %c0_i32, %c0_i32_0 : i32, i32
  }
  func.func @transform_3(%arg0: i32) -> (i32, i32) {
    %c0_i32 = arith.constant 0 : i32
    %c0_i32_0 = arith.constant 0 : i32
    %c0_i32_1 = arith.constant 0 : i32
    return %c0_i32, %c0_i32_0 : i32, i32
  }
  func.func @transform_4(%arg0: i32) -> (i32, i32) {
    %c0_i32 = arith.constant 0 : i32
    %c0_i32_0 = arith.constant 0 : i32
    %c0_i32_1 = arith.constant 0 : i32
    return %c0_i32, %c0_i32_0 : i32, i32
  }
  func.func @transform_5(%arg0: i32) -> (i32, i32) {
    %c0_i32 = arith.constant 0 : i32
    %c0_i32_0 = arith.constant 0 : i32
    %c0_i32_1 = arith.constant 0 : i32
    return %c0_i32, %c0_i32_0 : i32, i32
  }
  func.func @transform_6(%arg0: i32) -> (i32, i32) {
    %c0_i32 = arith.constant 0 : i32
    %c0_i32_0 = arith.constant 0 : i32
    %c0_i32_1 = arith.constant 0 : i32
    return %c0_i32, %c0_i32_0 : i32, i32
  }
  func.func @transform_7(%arg0: i32) -> (i32, i32) {
    %c0_i32 = arith.constant 0 : i32
    %c0_i32_0 = arith.constant 0 : i32
    return %arg0, %c0_i32 : i32, i32
  }
}

</mosaic_0001>

<llo_original>
// kernel: tpu_custom_call.1
$region0: #{tpu_custom_call.1}
  #allocation0 [shape = 'u32[]', space=smem, size = 0x4, offset = 0x4, fixed_abs, tag = 'smem constant byte address 0x4 - core index']
  #allocation1 [shape = 'u32[72,128]{1,0:T(1,128)}', space=vmem, size = 0x9000, scoped, tag = 'internal scratch']
  %s0 = inlined_call_operand.hbm [shape: f32[16,32], index: 0, kind: input, shape index: {}]
  %s1 = inlined_call_operand.hbm [shape: f32[32,128], index: 1, kind: input, shape index: {}]
  %s2 = inlined_call_operand.vmem [shape: f32[1,128], index: 2, kind: input, shape index: {}]
  %s3 = inlined_call_operand.hbm [shape: f32[128,128], index: 3, kind: input, shape index: {}]
  %s4 = inlined_call_operand.vmem [shape: f32[1,128], index: 4, kind: input, shape index: {}]
  %s5 = inlined_call_operand.hbm [shape: f32[128,128], index: 5, kind: input, shape index: {}]
  %s6 = inlined_call_operand.vmem [shape: f32[1,128], index: 6, kind: input, shape index: {}]
  %s7 = inlined_call_operand.hbm [shape: f32[16,128], index: 7, kind: output, shape index: {}]
  %s8 = sld [smem:[#allocation0]]
  $region77: #{tpu_custom_call.1} parent=0
    _
  %s10 = ssub.s32 1, %s8
  %s11 = scalar_select 0, %s10, %s8
  $region1: #{tpu_custom_call.1} parent=0
    #allocation2 [shape = 'u8[8192]{0}', space=vmem, size = 0x2000, scoped, tag = 'input window, operand 0']
    #allocation3 [shape = 's32[2]{0}', space=sflag, size = 0x8, scoped, tag = 'scoped memory for tpu_custom_call.1']
    #allocation4 [shape = 's32[2]{0}', space=sflag, size = 0x8, scoped, tag = 'scoped memory for tpu_custom_call.1']
    #allocation5 [shape = 'u8[16384]{0}', space=vmem, size = 0x4000, scoped, tag = 'input window, operand 1, single buffered']
    #allocation6 [shape = 's32[1]{0}', space=sflag, size = 0x4, scoped, tag = 'scoped memory for tpu_custom_call.1']
    #allocation7 [shape = 'u8[65536]{0}', space=vmem, size = 0x10000, scoped, tag = 'input window, operand 3, single buffered']
    #allocation8 [shape = 'u8[65536]{0}', space=vmem, size = 0x10000, scoped, tag = 'input window, operand 5, single buffered']
    #allocation9 [shape = 's32[1]{0}', space=sflag, size = 0x4, scoped, tag = 'scoped memory for tpu_custom_call.1']
    #allocation10 [shape = 'u8[8192]{0}', space=vmem, size = 0x2000, scoped, tag = 'output window, operand 0']
    %12 = vsyncpa [#allocation3], 0
    %s13 = scalar_lea.sflag [#allocation3], 1
    %14 = vsyncpa %s13, 0
    %15 = vsyncpa [#allocation6], 0
    %16 = vsyncpa [#allocation9], 0
    %17 = vsyncpa [#allocation4], 0
    %s18 = scalar_lea.sflag [#allocation4], 1
    %19 = vsyncpa %s18, 0
    loop: start=0, step=1, limit=4
    $region2: #{tpu_custom_call.1} parent=1 // loop_pre_header
      _
    $region3: #{tpu_custom_call.1} parent=1 // loop_header
      %s21 = sphi 0, %s25
      %p22 = scmp.ge.s32.totalorder %s21, 4
      %s31 = sphi 0, %s33
      %s34 = sphi 0, %s31
      %s35 = sphi 0, %s34
      %s51 = sphi 0, %s35
      %s55 = sphi 0, %s55
      %s57 = sphi 0, %s55
      %s58 = sphi 0, %s57
      %s72 = sphi 0, %s58
      %s76 = sphi 0, %s76
      %s78 = sphi 0, %s76
      %s79 = sphi 0, %s78
      %s93 = sphi 0, %s79
      %s97 = sphi 0, %s97
      %s99 = sphi 0, %s97
      %s100 = sphi 0, %s99
      %s114 = sphi 0, %s100
      %s118 = sphi 0, %s118
      %s120 = sphi 0, %s118
      %s121 = sphi 0, %s120
      %s135 = sphi 0, %s121
      %s139 = sphi 0, %s139
      %s141 = sphi 0, %s139
      %s142 = sphi 0, %s141
      %s156 = sphi 0, %s142
      %s160 = sphi 0, %s160
      %s162 = sphi 0, %s160
      %s163 = sphi 0, %s162
      %s177 = sphi 0, %s163
      %s183 = sphi 0, %s185
      %s186 = sphi 0, %s183
      %s187 = sphi 0, %s186
      %s203 = sphi 0, %s187
    $region4: #{tpu_custom_call.1} parent=1 // loop_header_branch
      %24 = sbr.rel (%p22) target = $region8
    $region5: #{tpu_custom_call.1} parent=1 // loop_body
      %s26 = ssub.s32 %s21, 1
      %s27 = ssub.s32 %s21, 2
      %s28 = sadd.s32 %s21, 1
      %s29 = ssub.s32 %s21, %s28
      %p30 = scmp.eq.s32.totalorder %s29, 0
      %s32 = sadd.s32 %s31, 1
      %s33 = scalar_select %p30, %s31, %s32
      %p36 = pneg %p30
      %p37 = scmp.eq.s32.totalorder %s21, 1
      %p38 = por %p36, %p37
      %p39 = scmp.ne.s32.totalorder %s31, %s34
      %p40 = scmp.eq.s32.totalorder %s21, 0
      %p41 = por %p39, %p40
      %p42 = scmp.ne.s32.totalorder %s31, %s34
      %p43 = scmp.eq.s32.totalorder %s26, 1
      %p44 = por %p42, %p43
      %p45 = scmp.ne.s32.totalorder %s34, %s35
      %p46 = scmp.eq.s32.totalorder %s26, 0
      %p47 = por %p45, %p46
      %p48 = scmp.ne.s32.totalorder %s34, %s35
      %p49 = scmp.eq.s32.totalorder %s27, 1
      %p50 = por %p48, %p49
      %p52 = scmp.ne.s32.totalorder %s35, %s51
      %p53 = scmp.eq.s32.totalorder %s27, 0
      %p54 = por %p52, %p53
      %s56 = sadd.s32 %s55, 1
      %p59 = scmp.eq.s32.totalorder %s21, 1
      %p60 = scmp.ne.s32.totalorder %s55, %s57
      %p61 = scmp.eq.s32.totalorder %s21, 0
      %p62 = por %p60, %p61
      %p63 = scmp.ne.s32.totalorder %s55, %s57
      %p64 = scmp.eq.s32.totalorder %s26, 1
      %p65 = por %p63, %p64
      %p66 = scmp.ne.s32.totalorder %s57, %s58
      %p67 = scmp.eq.s32.totalorder %s26, 0
      %p68 = por %p66, %p67
      %p69 = scmp.ne.s32.totalorder %s57, %s58
      %p70 = scmp.eq.s32.totalorder %s27, 1
      %p71 = por %p69, %p70
      %p73 = scmp.ne.s32.totalorder %s58, %s72
      %p74 = scmp.eq.s32.totalorder %s27, 0
      %p75 = por %p73, %p74
      %s77 = sadd.s32 %s76, 1
      %p80 = scmp.eq.s32.totalorder %s21, 1
      %p81 = scmp.ne.s32.totalorder %s76, %s78
      %p82 = scmp.eq.s32.totalorder %s21, 0
      %p83 = por %p81, %p82
      %p84 = scmp.ne.s32.totalorder %s76, %s78
      %p85 = scmp.eq.s32.totalorder %s26, 1
      %p86 = por %p84, %p85
      %p87 = scmp.ne.s32.totalorder %s78, %s79
      %p88 = scmp.eq.s32.totalorder %s26, 0
      %p89 = por %p87, %p88
      %p90 = scmp.ne.s32.totalorder %s78, %s79
      %p91 = scmp.eq.s32.totalorder %s27, 1
      %p92 = por %p90, %p91
      %p94 = scmp.ne.s32.totalorder %s79, %s93
      %p95 = scmp.eq.s32.totalorder %s27, 0
      %p96 = por %p94, %p95
      %s98 = sadd.s32 %s97, 1
      %p101 = scmp.eq.s32.totalorder %s21, 1
      %p102 = scmp.ne.s32.totalorder %s97, %s99
      %p103 = scmp.eq.s32.totalorder %s21, 0
      %p104 = por %p102, %p103
      %p105 = scmp.ne.s32.totalorder %s97, %s99
      %p106 = scmp.eq.s32.totalorder %s26, 1
      %p107 = por %p105, %p106
      %p108 = scmp.ne.s32.totalorder %s99, %s100
      %p109 = scmp.eq.s32.totalorder %s26, 0
      %p110 = por %p108, %p109
      %p111 = scmp.ne.s32.totalorder %s99, %s100
      %p112 = scmp.eq.s32.totalorder %s27, 1
      %p113 = por %p111, %p112
      %p115 = scmp.ne.s32.totalorder %s100, %s114
      %p116 = scmp.eq.s32.totalorder %s27, 0
      %p117 = por %p115, %p116
      %s119 = sadd.s32 %s118, 1
      %p122 = scmp.eq.s32.totalorder %s21, 1
      %p123 = scmp.ne.s32.totalorder %s118, %s120
      %p124 = scmp.eq.s32.totalorder %s21, 0
      %p125 = por %p123, %p124
      %p126 = scmp.ne.s32.totalorder %s118, %s120
      %p127 = scmp.eq.s32.totalorder %s26, 1
      %p128 = por %p126, %p127
      %p129 = scmp.ne.s32.totalorder %s120, %s121
      %p130 = scmp.eq.s32.totalorder %s26, 0
      %p131 = por %p129, %p130
      %p132 = scmp.ne.s32.totalorder %s120, %s121
      %p133 = scmp.eq.s32.totalorder %s27, 1
      %p134 = por %p132, %p133
      %p136 = scmp.ne.s32.totalorder %s121, %s135
      %p137 = scmp.eq.s32.totalorder %s27, 0
      %p138 = por %p136, %p137
      %s140 = sadd.s32 %s139, 1
      %p143 = scmp.eq.s32.totalorder %s21, 1
      %p144 = scmp.ne.s32.totalorder %s139, %s141
      %p145 = scmp.eq.s32.totalorder %s21, 0
      %p146 = por %p144, %p145
      %p147 = scmp.ne.s32.totalorder %s139, %s141
      %p148 = scmp.eq.s32.totalorder %s26, 1
      %p149 = por %p147, %p148
      %p150 = scmp.ne.s32.totalorder %s141, %s142
      %p151 = scmp.eq.s32.totalorder %s26, 0
      %p152 = por %p150, %p151
      %p153 = scmp.ne.s32.totalorder %s141, %s142
      %p154 = scmp.eq.s32.totalorder %s27, 1
      %p155 = por %p153, %p154
      %p157 = scmp.ne.s32.totalorder %s142, %s156
      %p158 = scmp.eq.s32.totalorder %s27, 0
      %p159 = por %p157, %p158
      %s161 = sadd.s32 %s160, 1
      %p164 = scmp.eq.s32.totalorder %s21, 1
      %p165 = scmp.ne.s32.totalorder %s160, %s162
      %p166 = scmp.eq.s32.totalorder %s21, 0
      %p167 = por %p165, %p166
      %p168 = scmp.ne.s32.totalorder %s160, %s162
      %p169 = scmp.eq.s32.totalorder %s26, 1
      %p170 = por %p168, %p169
      %p171 = scmp.ne.s32.totalorder %s162, %s163
      %p172 = scmp.eq.s32.totalorder %s26, 0
      %p173 = por %p171, %p172
      %p174 = scmp.ne.s32.totalorder %s162, %s163
      %p175 = scmp.eq.s32.totalorder %s27, 1
      %p176 = por %p174, %p175
      %p178 = scmp.ne.s32.totalorder %s163, %s177
      %p179 = scmp.eq.s32.totalorder %s27, 0
      %p180 = por %p178, %p179
      %s181 = ssub.s32 %s21, %s28
      %p182 = scmp.eq.s32.totalorder %s181, 0
      %s184 = sadd.s32 %s183, 1
      %s185 = scalar_select %p182, %s183, %s184
      %p188 = pneg %p182
      %p189 = scmp.eq.s32.totalorder %s21, 1
      %p190 = por %p188, %p189
      %p191 = scmp.ne.s32.totalorder %s183, %s186
      %p192 = scmp.eq.s32.totalorder %s21, 0
      %p193 = por %p191, %p192
      %p194 = scmp.ne.s32.totalorder %s183, %s186
      %p195 = scmp.eq.s32.totalorder %s26, 1
      %p196 = por %p194, %p195
      %p197 = scmp.ne.s32.totalorder %s186, %s187
      %p198 = scmp.eq.s32.totalorder %s26, 0
      %p199 = por %p197, %p198
      %p200 = scmp.ne.s32.totalorder %s186, %s187
      %p201 = scmp.eq.s32.totalorder %s27, 1
      %p202 = por %p200, %p201
      %p204 = scmp.ne.s32.totalorder %s187, %s203
      %p205 = scmp.eq.s32.totalorder %s27, 0
      %p206 = por %p204, %p205
      %p207 = scmp.le.s32.totalorder 1, %s21
      %p208 = scmp.lt.s32.totalorder %s21, 3
      %p209 = pnand %p207, %p208
      %p210 = pneg %p209
      // Predicated region
      $region9: #{tpu_custom_call.1} parent=5 // pred_check
        _
      $region10: #{tpu_custom_call.1} parent=5 // pred_check_branch
        %212 = sbr.rel (%p209) target = $region12
      $region11: #{tpu_custom_call.1} parent=5 // pred_region
        %s213 = ssub.s32 %s21, 1
        // Predicated region
        $region13: #{tpu_custom_call.1} parent=11 // pred_check
          %p214 = pneg %p68
        $region14: #{tpu_custom_call.1} parent=11 // pred_check_branch
          %216 = sbr.rel (%p214) target = $region16
        $region15: #{tpu_custom_call.1} parent=11 // pred_region
          %218 = vsyncadd [#allocation6], 0
          %s219 = sshll.u32 %s1, 4
          %s220 = int_to_ptr.hbm [resolvable:$true] %s219
          %s221 = sshll.u32 [#allocation5], 4
          %s222 = int_to_ptr.vmem [resolvable:$true] %s221
          %227 = dma.hbm_to_vmem [thread:$0]  %s220, 512, %s222, [#allocation6], 128, 128, 8
        $region16: #{tpu_custom_call.1} parent=11 // pred_fallthru
          _
        // Predicated region
        $region17: #{tpu_custom_call.1} parent=11 // pred_check
          %p228 = pneg %p89
        $region18: #{tpu_custom_call.1} parent=11 // pred_check_branch
          %230 = sbr.rel (%p228) target = $region20
        $region19: #{tpu_custom_call.1} parent=11 // pred_region
          _
        $region20: #{tpu_custom_call.1} parent=11 // pred_fallthru
          _
        // Predicated region
        $region21: #{tpu_custom_call.1} parent=11 // pred_check
          %p231 = pneg %p110
        $region22: #{tpu_custom_call.1} parent=11 // pred_check_branch
          %233 = sbr.rel (%p231) target = $region24
        $region23: #{tpu_custom_call.1} parent=11 // pred_region
          %235 = vsyncadd [#allocation6], 0
          %s236 = sshll.u32 %s3, 4
          %s237 = int_to_ptr.hbm [resolvable:$true] %s236
          %s238 = sshll.u32 [#allocation7], 4
          %s239 = int_to_ptr.vmem [resolvable:$true] %s238
          %244 = dma.hbm_to_vmem [thread:$0]  %s237, 2048, %s239, [#allocation6], 128, 128, 8
        $region24: #{tpu_custom_call.1} parent=11 // pred_fallthru
          _
        // Predicated region
        $region25: #{tpu_custom_call.1} parent=11 // pred_check
          %p245 = pneg %p131
        $region26: #{tpu_custom_call.1} parent=11 // pred_check_branch
          %247 = sbr.rel (%p245) target = $region28
        $region27: #{tpu_custom_call.1} parent=11 // pred_region
          _
        $region28: #{tpu_custom_call.1} parent=11 // pred_fallthru
          _
        // Predicated region
        $region29: #{tpu_custom_call.1} parent=11 // pred_check
          %p248 = pneg %p152
        $region30: #{tpu_custom_call.1} parent=11 // pred_check_branch
          %250 = sbr.rel (%p248) target = $region32
        $region31: #{tpu_custom_call.1} parent=11 // pred_region
          %252 = vsyncadd [#allocation9], 0
          %s253 = sshll.u32 %s5, 4
          %s254 = int_to_ptr.hbm [resolvable:$true] %s253
          %s255 = sshll.u32 [#allocation8], 4
          %s256 = int_to_ptr.vmem [resolvable:$true] %s255
          %261 = dma.hbm_to_vmem [thread:$0]  %s254, 2048, %s256, [#allocation9], 128, 128, 8
        $region32: #{tpu_custom_call.1} parent=11 // pred_fallthru
          _
        // Predicated region
        $region33: #{tpu_custom_call.1} parent=11 // pred_check
          %p262 = pneg %p173
        $region34: #{tpu_custom_call.1} parent=11 // pred_check_branch
          %264 = sbr.rel (%p262) target = $region36
        $region35: #{tpu_custom_call.1} parent=11 // pred_region
          _
        $region36: #{tpu_custom_call.1} parent=11 // pred_fallthru
          _
      $region12: #{tpu_custom_call.1} parent=5 // pred_fallthru
        _
      %p265 = scmp.lt.s32.totalorder %s21, 2
      // Predicated region
      $region37: #{tpu_custom_call.1} parent=5 // pred_check
        %p266 = pneg %p265
      $region38: #{tpu_custom_call.1} parent=5 // pred_check_branch
        %268 = sbr.rel (%p266) target = $region40
      $region39: #{tpu_custom_call.1} parent=5 // pred_region
        // Predicated region
        $region41: #{tpu_custom_call.1} parent=39 // pred_check
          %p269 = pneg %p41
        $region42: #{tpu_custom_call.1} parent=39 // pred_check_branch
          %271 = sbr.rel (%p269) target = $region44
        $region43: #{tpu_custom_call.1} parent=39 // pred_region
          %s272 = sand.u32 %s31, 1
          %s273 = scalar_lea.sflag [#allocation3], %s272
          %s274 = sand.u32 %s31, 1
          %s275 = smul.addr %s274, 8
          %s276 = scalar_lea.vmem [#allocation2], %s275
          %278 = vsyncadd %s273, 0
          %s279 = smul.addr %s21, 8
          %s280 = scalar_lea.hbm %s0, %s279
          %s282 = sshll.u32 %s280, 4
          %s283 = int_to_ptr.hbm [resolvable:$true] %s282
          %s284 = sshll.u32 %s276, 4
          %s285 = int_to_ptr.vmem [resolvable:$true] %s284
          %287 = dma.hbm_to_vmem [thread:$0]  %s283, 128, %s285, %s273
        $region44: #{tpu_custom_call.1} parent=39 // pred_fallthru
          _
      $region40: #{tpu_custom_call.1} parent=5 // pred_fallthru
        _
      %p288 = scmp.le.s32.totalorder 1, %s21
      %p289 = scmp.lt.s32.totalorder %s21, 3
      %p290 = pnand %p288, %p289
      %p291 = pneg %p290
      // Predicated region
      $region45: #{tpu_custom_call.1} parent=5 // pred_check
        _
      $region46: #{tpu_custom_call.1} parent=5 // pred_check_branch
        %293 = sbr.rel (%p290) target = $region48
      $region47: #{tpu_custom_call.1} parent=5 // pred_region
        %s294 = ssub.s32 %s21, 1
        %s295 = sand.u32 %s34, 1
        %s296 = scalar_lea.sflag [#allocation3], %s295
        %s297 = sand.u32 %s34, 1
        %s298 = smul.addr %s297, 8
        %s299 = scalar_lea.vmem [#allocation2], %s298
        // Predicated region
        $region49: #{tpu_custom_call.1} parent=47 // pred_check
          %p300 = pneg %p47
        $region50: #{tpu_custom_call.1} parent=47 // pred_check_branch
          %302 = sbr.rel (%p300) target = $region52
        $region51: #{tpu_custom_call.1} parent=47 // pred_region
          %304 = dma.done %s296, 128
        $region52: #{tpu_custom_call.1} parent=47 // pred_fallthru
          _
        // Predicated region
        $region53: #{tpu_custom_call.1} parent=47 // pred_check
          %p305 = pneg %p68
        $region54: #{tpu_custom_call.1} parent=47 // pred_check_branch
          %307 = sbr.rel (%p305) target = $region56
        $region55: #{tpu_custom_call.1} parent=47 // pred_region
          %309 = dma.done [#allocation6], 512
        $region56: #{tpu_custom_call.1} parent=47 // pred_fallthru
          _
        // Predicated region
        $region57: #{tpu_custom_call.1} parent=47 // pred_check
          %p310 = pneg %p110
        $region58: #{tpu_custom_call.1} parent=47 // pred_check_branch
          %312 = sbr.rel (%p310) target = $region60
        $region59: #{tpu_custom_call.1} parent=47 // pred_region
          %314 = dma.done [#allocation6], 2048
        $region60: #{tpu_custom_call.1} parent=47 // pred_fallthru
          _
        // Predicated region
        $region61: #{tpu_custom_call.1} parent=47 // pred_check
          %p315 = pneg %p152
        $region62: #{tpu_custom_call.1} parent=47 // pred_check_branch
          %317 = sbr.rel (%p315) target = $region64
        $region63: #{tpu_custom_call.1} parent=47 // pred_region
          %319 = dma.done [#allocation9], 2048
        $region64: #{tpu_custom_call.1} parent=47 // pred_fallthru
          _
        %s320 = sand.u32 %s34, 1
        %s321 = scalar_lea.sflag [#allocation3], %s320
        %s322 = sand.u32 %s34, 1
        %s323 = smul.addr %s322, 8
        %s324 = scalar_lea.vmem [#allocation2], %s323
        %p325 = pneg %p47
        %p326 = pneg %p44
        %p327 = pneg %p68
        %p328 = pneg %p65
        %p329 = pneg %p89
        %p330 = pneg %p86
        %p331 = pneg %p110
        %p332 = pneg %p107
        %p333 = pneg %p131
        %p334 = pneg %p128
        %p335 = pneg %p152
        %p336 = pneg %p149
        %p337 = pneg %p173
        %p338 = pneg %p170
        %p339 = pneg %p199
        %p340 = pneg %p196
        %s341 = sand.u32 %s186, 1
        %s342 = scalar_lea.sflag [#allocation4], %s341
        %s343 = sand.u32 %s186, 1
        %s344 = smul.addr %s343, 8
        %s345 = scalar_lea.vmem [#allocation10], %s344
        %v346 = vld [vmem:[%s299] sm:$0xff]
        %v347 = vld [vmem:[#allocation5] sm:$0xff]
        %v348 = vld [vmem:[#allocation5 + $0x8] sm:$0xff]
        %v349 = vld [vmem:[#allocation5 + $0x10] sm:$0xff]
        %v350 = vld [vmem:[#allocation5 + $0x18] sm:$0xff]
        %v351 = vld [vmem:[%s2] sm:$0x1]
        %v353 = vperm.slane %v351, 0
        %vm355 = vcmask 261120
        %v357 = vsel %vm355, %v346, 0
        %359 = vmatpush.msra.mxu0 0.0
        %360 = vmatpush.msra.mxu0 0.0
        %361 = vmatpush.msra.mxu0 0.0
        %362 = vmatpush.msra.mxu0 0.0
        %363 = vmatpush.msra.mxu0 0.0
        %364 = vmatpush.msra.mxu0 0.0
        %365 = vmatpush.msra.mxu0 0.0
        %366 = vmatpush.msra.mxu0 0.0
        %367 = vmatpush.msra.mxu0 0.0
        %368 = vmatpush.msra.mxu0 0.0
        %369 = vmatpush.msra.mxu0 0.0
        %370 = vmatpush.msra.mxu0 0.0
        %371 = vmatpush.msra.mxu0 %v350
        %372 = vmatpush.msra.mxu0 %v349
        %373 = vmatpush.msra.mxu0 %v348
        %374 = vmatpush.msra.mxu0 %v347
        %375 = vmatmul.f32.gmra.mxu0 %v357
        %v376 = vpop.f32.mrf.mxu0
        %v377 = vadd.f32 %v353, %v376
        %378 = vdwg.mxu0
        %v379 = vxor.u32 %v377, 2147483648
        %v380 = vmul.f32 %v379, 1.442695
        %v381 = vpow.pop %v380
        %v382 = vadd.f32 %v381, 1.0
        %v383 = vrcp.pop %v382
        %v384 = vmul.f32 %v382, %v383
        %v385 = vsub.f32 1.0, %v384
        %v386 = vmul.f32 %v383, %v385
        %v387 = vadd.f32 %v383, %v386
        %vm388 = vweird.f32 %v382
        %vm389 = vweird.f32 %v383
        %vm390 = vmor %vm388, %vm389
        %v391 = vsel %vm390, %v383, %v387
        %v392 = vand.u32 2147483647, %v382
        %vm393 = vcmp.eq.f32.partialorder %v392, 8.507059e+37
        %v394 = vand.u32 %v382, 2147483648
        %v395 = vor.u32 1.1754944e-38, %v394
        %v396 = vsel %vm393, %v395, %v391
        %v397 = vmul.f32 1.0, %v396
        %v398 = vld [vmem:[#allocation7] sm:$0xff]
        %v399 = vld [vmem:[#allocation7 + $0x8] sm:$0xff]
        %v400 = vld [vmem:[#allocation7 + $0x10] sm:$0xff]
        %v401 = vld [vmem:[#allocation7 + $0x18] sm:$0xff]
        %v402 = vld [vmem:[#allocation7 + $0x20] sm:$0xff]
        %v403 = vld [vmem:[#allocation7 + $0x28] sm:$0xff]
        %v404 = vld [vmem:[#allocation7 + $0x30] sm:$0xff]
        %v405 = vld [vmem:[#allocation7 + $0x38] sm:$0xff]
        %v406 = vld [vmem:[#allocation7 + $0x40] sm:$0xff]
        %v407 = vld [vmem:[#allocation7 + $0x48] sm:$0xff]
        %v408 = vld [vmem:[#allocation7 + $0x50] sm:$0xff]
        %v409 = vld [vmem:[#allocation7 + $0x58] sm:$0xff]
        %v410 = vld [vmem:[#allocation7 + $0x60] sm:$0xff]
        %v411 = vld [vmem:[#allocation7 + $0x68] sm:$0xff]
        %v412 = vld [vmem:[#allocation7 + $0x70] sm:$0xff]
        %v413 = vld [vmem:[#allocation7 + $0x78] sm:$0xff]
        %v414 = vld [vmem:[%s4] sm:$0x1]
        %v416 = vperm.slane %v414, 0
        %418 = vmatpush.msra.mxu0 %v413
        %419 = vmatpush.msra.mxu0 %v412
        %420 = vmatpush.msra.mxu0 %v411
        %421 = vmatpush.msra.mxu0 %v410
        %422 = vmatpush.msra.mxu0 %v409
        %423 = vmatpush.msra.mxu0 %v408
        %424 = vmatpush.msra.mxu0 %v407
        %425 = vmatpush.msra.mxu0 %v406
        %426 = vmatpush.msra.mxu0 %v405
        %427 = vmatpush.msra.mxu0 %v404
        %428 = vmatpush.msra.mxu0 %v403
        %429 = vmatpush.msra.mxu0 %v402
        %430 = vmatpush.msra.mxu0 %v401
        %431 = vmatpush.msra.mxu0 %v400
        %432 = vmatpush.msra.mxu0 %v399
        %433 = vmatpush.msra.mxu0 %v398
        %434 = vmatmul.f32.gmra.mxu0 %v397
        %v435 = vpop.f32.mrf.mxu0
        %v436 = vadd.f32 %v416, %v435
        %437 = vdwg.mxu0
        %v438 = vxor.u32 %v436, 2147483648
        %v439 = vmul.f32 %v438, 1.442695
        %v440 = vpow.pop %v439
        %v441 = vadd.f32 %v440, 1.0
        %v442 = vrcp.pop %v441
        %v443 = vmul.f32 %v441, %v442
        %v444 = vsub.f32 1.0, %v443
        %v445 = vmul.f32 %v442, %v444
        %v446 = vadd.f32 %v442, %v445
        %vm447 = vweird.f32 %v441
        %vm448 = vweird.f32 %v442
        %vm449 = vmor %vm447, %vm448
        %v450 = vsel %vm449, %v442, %v446
        %v451 = vand.u32 2147483647, %v441
        %vm452 = vcmp.eq.f32.partialorder %v451, 8.507059e+37
        %v453 = vand.u32 %v441, 2147483648
        %v454 = vor.u32 1.1754944e-38, %v453
        %v455 = vsel %vm452, %v454, %v450
        %v456 = vmul.f32 1.0, %v455
        %v457 = vld [vmem:[#allocation8] sm:$0xff]
        %v458 = vld [vmem:[#allocation8 + $0x8] sm:$0xff]
        %v459 = vld [vmem:[#allocation8 + $0x10] sm:$0xff]
        %v460 = vld [vmem:[#allocation8 + $0x18] sm:$0xff]
        %v461 = vld [vmem:[#allocation8 + $0x20] sm:$0xff]
        %v462 = vld [vmem:[#allocation8 + $0x28] sm:$0xff]
        %v463 = vld [vmem:[#allocation8 + $0x30] sm:$0xff]
        %v464 = vld [vmem:[#allocation8 + $0x38] sm:$0xff]
        %v465 = vld [vmem:[#allocation8 + $0x40] sm:$0xff]
        %v466 = vld [vmem:[#allocation8 + $0x48] sm:$0xff]
        %v467 = vld [vmem:[#allocation8 + $0x50] sm:$0xff]
        %v468 = vld [vmem:[#allocation8 + $0x58] sm:$0xff]
        %v469 = vld [vmem:[#allocation8 + $0x60] sm:$0xff]
        %v470 = vld [vmem:[#allocation8 + $0x68] sm:$0xff]
        %v471 = vld [vmem:[#allocation8 + $0x70] sm:$0xff]
        %v472 = vld [vmem:[#allocation8 + $0x78] sm:$0xff]
        %v473 = vld [vmem:[%s6] sm:$0x1]
        %v475 = vperm.slane %v473, 0
        %477 = vmatpush.msra.mxu0 %v472
        %478 = vmatpush.msra.mxu0 %v471
        %479 = vmatpush.msra.mxu0 %v470
        %480 = vmatpush.msra.mxu0 %v469
        %481 = vmatpush.msra.mxu0 %v468
        %482 = vmatpush.msra.mxu0 %v467
        %483 = vmatpush.msra.mxu0 %v466
        %484 = vmatpush.msra.mxu0 %v465
        %485 = vmatpush.msra.mxu0 %v464
        %486 = vmatpush.msra.mxu0 %v463
        %487 = vmatpush.msra.mxu0 %v462
        %488 = vmatpush.msra.mxu0 %v461
        %489 = vmatpush.msra.mxu0 %v460
        %490 = vmatpush.msra.mxu0 %v459
        %491 = vmatpush.msra.mxu0 %v458
        %492 = vmatpush.msra.mxu0 %v457
        %493 = vmatmul.f32.gmra.mxu0 %v456
        %v494 = vpop.f32.mrf.mxu0
        %v495 = vadd.f32 %v475, %v494
        %496 = vdwg.mxu0
        %497 = vst [vmem:[%s345] sm:$0xff] %v495
        %s498 = sand.u32 %s186, 1
        %s499 = scalar_lea.sflag [#allocation4], %s498
        %s500 = sand.u32 %s186, 1
        %s501 = smul.addr %s500, 8
        %s502 = scalar_lea.vmem [#allocation10], %s501
        // Predicated region
        $region65: #{tpu_custom_call.1} parent=47 // pred_check
          %p503 = pneg %p196
        $region66: #{tpu_custom_call.1} parent=47 // pred_check_branch
          %505 = sbr.rel (%p503) target = $region68
        $region67: #{tpu_custom_call.1} parent=47 // pred_region
          %507 = vsyncadd %s499, 0
          %s508 = smul.addr %s26, 8
          %s509 = scalar_lea.hbm %s7, %s508
          %s511 = sshll.u32 %s502, 4
          %s512 = int_to_ptr.vmem [resolvable:$true] %s511
          %s513 = sshll.u32 %s509, 4
          %s514 = int_to_ptr.hbm [resolvable:$true] %s513
          %516 = dma.vmem_to_hbm [thread:$0]  %s512, 128, %s514, %s499
        $region68: #{tpu_custom_call.1} parent=47 // pred_fallthru
          _
      $region48: #{tpu_custom_call.1} parent=5 // pred_fallthru
        _
      %p517 = scmp.le.s32.totalorder 2, %s21
      // Predicated region
      $region69: #{tpu_custom_call.1} parent=5 // pred_check
        %p518 = pneg %p517
      $region70: #{tpu_custom_call.1} parent=5 // pred_check_branch
        %520 = sbr.rel (%p518) target = $region72
      $region71: #{tpu_custom_call.1} parent=5 // pred_region
        %s521 = ssub.s32 %s21, 2
        // Predicated region
        $region73: #{tpu_custom_call.1} parent=71 // pred_check
          %p522 = pneg %p202
        $region74: #{tpu_custom_call.1} parent=71 // pred_check_branch
          %524 = sbr.rel (%p522) target = $region76
        $region75: #{tpu_custom_call.1} parent=71 // pred_region
          %s525 = sand.u32 %s187, 1
          %s526 = scalar_lea.sflag [#allocation4], %s525
          %s527 = sand.u32 %s187, 1
          %s528 = smul.addr %s527, 8
          %s529 = scalar_lea.vmem [#allocation10], %s528
          %531 = dma.done %s526, 128
        $region76: #{tpu_custom_call.1} parent=71 // pred_fallthru
          _
      $region72: #{tpu_custom_call.1} parent=5 // pred_fallthru
        _
    $region6: #{tpu_custom_call.1} parent=1 // loop_footer
      %s25 = sadd.s32 1, %s21
    $region7: #{tpu_custom_call.1} parent=1 // loop_footer_branch
      %20 = sbr.rel target = $region3
    $region8: #{tpu_custom_call.1} parent=1 // loop_exit
      _
    %532 = vsyncpa [#allocation3], 1
    %s533 = scalar_lea.sflag [#allocation3], 1
    %534 = vsyncpa %s533, 1
    %535 = vsyncpa [#allocation6], 1
    %536 = vsyncpa [#allocation9], 1
    %537 = vsyncpa [#allocation4], 1
    %s538 = scalar_lea.sflag [#allocation4], 1
    %539 = vsyncpa %s538, 1

// kernel: tpu_custom_call.1
$region0: #{tpu_custom_call.1}
  #allocation0 [shape = 'u32[]', space=smem, size = 0x4, offset = 0x4, fixed_abs, tag = 'smem constant byte address 0x4 - core index']
  #allocation1 [shape = 'u32[72,128]{1,0:T(1,128)}', space=vmem, size = 0x9000, scoped, tag = 'internal scratch']
  %s0 = inlined_call_operand.hbm [shape: f32[16,32], index: 0, kind: input, shape index: {}]
  %s1 = inlined_call_operand.hbm [shape: f32[32,128], index: 1, kind: input, shape index: {}]
  %s2 = inlined_call_operand.vmem [shape: f32[1,128], index: 2, kind: input, shape index: {}]
  %s3 = inlined_call_operand.hbm [shape: f32[128,128], index: 3, kind: input, shape index: {}]
  %s4 = inlined_call_operand.vmem [shape: f32[1,128], index: 4, kind: input, shape index: {}]
  %s5 = inlined_call_operand.hbm [shape: f32[128,128], index: 5, kind: input, shape index: {}]
  %s6 = inlined_call_operand.vmem [shape: f32[1,128], index: 6, kind: input, shape index: {}]
  %s7 = inlined_call_operand.hbm [shape: f32[16,128], index: 7, kind: output, shape index: {}]
  %s8 = sld [smem:[#allocation0]]
  $region77: #{tpu_custom_call.1} parent=0
    _
  %s10 = ssub.s32 1, %s8
  %s11 = scalar_select 0, %s10, %s8
  $region1: #{tpu_custom_call.1} parent=0
    #allocation2 [shape = 'u8[8192]{0}', space=vmem, size = 0x2000, scoped, tag = 'input window, operand 0']
    #allocation3 [shape = 's32[2]{0}', space=sflag, size = 0x8, scoped, tag = 'scoped memory for tpu_custom_call.1']
    #allocation4 [shape = 's32[2]{0}', space=sflag, size = 0x8, scoped, tag = 'scoped memory for tpu_custom_call.1']
    #allocation5 [shape = 'u8[16384]{0}', space=vmem, size = 0x4000, scoped, tag = 'input window, operand 1, single buffered']
    #allocation6 [shape = 's32[1]{0}', space=sflag, size = 0x4, scoped, tag = 'scoped memory for tpu_custom_call.1']
    #allocation7 [shape = 'u8[65536]{0}', space=vmem, size = 0x10000, scoped, tag = 'input window, operand 3, single buffered']
    #allocation8 [shape = 'u8[65536]{0}', space=vmem, size = 0x10000, scoped, tag = 'input window, operand 5, single buffered']
    #allocation9 [shape = 's32[1]{0}', space=sflag, size = 0x4, scoped, tag = 'scoped memory for tpu_custom_call.1']
    #allocation10 [shape = 'u8[8192]{0}', space=vmem, size = 0x2000, scoped, tag = 'output window, operand 0']
    %12 = vsyncpa [#allocation3], 0
    %s13 = scalar_lea.sflag [#allocation3], 1
    %14 = vsyncpa %s13, 0
    %15 = vsyncpa [#allocation6], 0
    %16 = vsyncpa [#allocation9], 0
    %17 = vsyncpa [#allocation4], 0
    %s18 = scalar_lea.sflag [#allocation4], 1
    %19 = vsyncpa %s18, 0
    loop: start=0, step=1, limit=4
    $region2: #{tpu_custom_call.1} parent=1 // loop_pre_header
      _
    $region3: #{tpu_custom_call.1} parent=1 // loop_header
      %s21 = sphi 0, %s25
      %p22 = scmp.ge.s32.totalorder %s21, 4
      %s31 = sphi 0, %s33
      %s34 = sphi 0, %s31
      %s35 = sphi 0, %s34
      %s51 = sphi 0, %s35
      %s55 = sphi 0, %s55
      %s57 = sphi 0, %s55
      %s58 = sphi 0, %s57
      %s72 = sphi 0, %s58
      %s76 = sphi 0, %s76
      %s78 = sphi 0, %s76
      %s79 = sphi 0, %s78
      %s93 = sphi 0, %s79
      %s97 = sphi 0, %s97
      %s99 = sphi 0, %s97
      %s100 = sphi 0, %s99
      %s114 = sphi 0, %s100
      %s118 = sphi 0, %s118
      %s120 = sphi 0, %s118
      %s121 = sphi 0, %s120
      %s135 = sphi 0, %s121
      %s139 = sphi 0, %s139
      %s141 = sphi 0, %s139
      %s142 = sphi 0, %s141
      %s156 = sphi 0, %s142
      %s160 = sphi 0, %s160
      %s162 = sphi 0, %s160
      %s163 = sphi 0, %s162
      %s177 = sphi 0, %s163
      %s183 = sphi 0, %s185
      %s186 = sphi 0, %s183
      %s187 = sphi 0, %s186
      %s203 = sphi 0, %s187
    $region4: #{tpu_custom_call.1} parent=1 // loop_header_branch
      %24 = sbr.rel (%p22) target = $region8
    $region5: #{tpu_custom_call.1} parent=1 // loop_body
      %s26 = ssub.s32 %s21, 1
      %s27 = ssub.s32 %s21, 2
      %s28 = sadd.s32 %s21, 1
      %s29 = ssub.s32 %s21, %s28
      %p30 = scmp.eq.s32.totalorder %s29, 0
      %s32 = sadd.s32 %s31, 1
      %s33 = scalar_select %p30, %s31, %s32
      %p36 = pneg %p30
      %p37 = scmp.eq.s32.totalorder %s21, 1
      %p38 = por %p36, %p37
      %p39 = scmp.ne.s32.totalorder %s31, %s34
      %p40 = scmp.eq.s32.totalorder %s21, 0
      %p41 = por %p39, %p40
      %p42 = scmp.ne.s32.totalorder %s31, %s34
      %p43 = scmp.eq.s32.totalorder %s26, 1
      %p44 = por %p42, %p43
      %p45 = scmp.ne.s32.totalorder %s34, %s35
      %p46 = scmp.eq.s32.totalorder %s26, 0
      %p47 = por %p45, %p46
      %p48 = scmp.ne.s32.totalorder %s34, %s35
      %p49 = scmp.eq.s32.totalorder %s27, 1
      %p50 = por %p48, %p49
      %p52 = scmp.ne.s32.totalorder %s35, %s51
      %p53 = scmp.eq.s32.totalorder %s27, 0
      %p54 = por %p52, %p53
      %s56 = sadd.s32 %s55, 1
      %p59 = scmp.eq.s32.totalorder %s21, 1
      %p60 = scmp.ne.s32.totalorder %s55, %s57
      %p61 = scmp.eq.s32.totalorder %s21, 0
      %p62 = por %p60, %p61
      %p63 = scmp.ne.s32.totalorder %s55, %s57
      %p64 = scmp.eq.s32.totalorder %s26, 1
      %p65 = por %p63, %p64
      %p66 = scmp.ne.s32.totalorder %s57, %s58
      %p67 = scmp.eq.s32.totalorder %s26, 0
      %p68 = por %p66, %p67
      %p69 = scmp.ne.s32.totalorder %s57, %s58
      %p70 = scmp.eq.s32.totalorder %s27, 1
      %p71 = por %p69, %p70
      %p73 = scmp.ne.s32.totalorder %s58, %s72
      %p74 = scmp.eq.s32.totalorder %s27, 0
      %p75 = por %p73, %p74
      %s77 = sadd.s32 %s76, 1
      %p80 = scmp.eq.s32.totalorder %s21, 1
      %p81 = scmp.ne.s32.totalorder %s76, %s78
      %p82 = scmp.eq.s32.totalorder %s21, 0
      %p83 = por %p81, %p82
      %p84 = scmp.ne.s32.totalorder %s76, %s78
      %p85 = scmp.eq.s32.totalorder %s26, 1
      %p86 = por %p84, %p85
      %p87 = scmp.ne.s32.totalorder %s78, %s79
      %p88 = scmp.eq.s32.totalorder %s26, 0
      %p89 = por %p87, %p88
      %p90 = scmp.ne.s32.totalorder %s78, %s79
      %p91 = scmp.eq.s32.totalorder %s27, 1
      %p92 = por %p90, %p91
      %p94 = scmp.ne.s32.totalorder %s79, %s93
      %p95 = scmp.eq.s32.totalorder %s27, 0
      %p96 = por %p94, %p95
      %s98 = sadd.s32 %s97, 1
      %p101 = scmp.eq.s32.totalorder %s21, 1
      %p102 = scmp.ne.s32.totalorder %s97, %s99
      %p103 = scmp.eq.s32.totalorder %s21, 0
      %p104 = por %p102, %p103
      %p105 = scmp.ne.s32.totalorder %s97, %s99
      %p106 = scmp.eq.s32.totalorder %s26, 1
      %p107 = por %p105, %p106
      %p108 = scmp.ne.s32.totalorder %s99, %s100
      %p109 = scmp.eq.s32.totalorder %s26, 0
      %p110 = por %p108, %p109
      %p111 = scmp.ne.s32.totalorder %s99, %s100
      %p112 = scmp.eq.s32.totalorder %s27, 1
      %p113 = por %p111, %p112
      %p115 = scmp.ne.s32.totalorder %s100, %s114
      %p116 = scmp.eq.s32.totalorder %s27, 0
      %p117 = por %p115, %p116
      %s119 = sadd.s32 %s118, 1
      %p122 = scmp.eq.s32.totalorder %s21, 1
      %p123 = scmp.ne.s32.totalorder %s118, %s120
      %p124 = scmp.eq.s32.totalorder %s21, 0
      %p125 = por %p123, %p124
      %p126 = scmp.ne.s32.totalorder %s118, %s120
      %p127 = scmp.eq.s32.totalorder %s26, 1
      %p128 = por %p126, %p127
      %p129 = scmp.ne.s32.totalorder %s120, %s121
      %p130 = scmp.eq.s32.totalorder %s26, 0
      %p131 = por %p129, %p130
      %p132 = scmp.ne.s32.totalorder %s120, %s121
      %p133 = scmp.eq.s32.totalorder %s27, 1
      %p134 = por %p132, %p133
      %p136 = scmp.ne.s32.totalorder %s121, %s135
      %p137 = scmp.eq.s32.totalorder %s27, 0
      %p138 = por %p136, %p137
      %s140 = sadd.s32 %s139, 1
      %p143 = scmp.eq.s32.totalorder %s21, 1
      %p144 = scmp.ne.s32.totalorder %s139, %s141
      %p145 = scmp.eq.s32.totalorder %s21, 0
      %p146 = por %p144, %p145
      %p147 = scmp.ne.s32.totalorder %s139, %s141
      %p148 = scmp.eq.s32.totalorder %s26, 1
      %p149 = por %p147, %p148
      %p150 = scmp.ne.s32.totalorder %s141, %s142
      %p151 = scmp.eq.s32.totalorder %s26, 0
      %p152 = por %p150, %p151
      %p153 = scmp.ne.s32.totalorder %s141, %s142
      %p154 = scmp.eq.s32.totalorder %s27, 1
      %p155 = por %p153, %p154
      %p157 = scmp.ne.s32.totalorder %s142, %s156
      %p158 = scmp.eq.s32.totalorder %s27, 0
      %p159 = por %p157, %p158
      %s161 = sadd.s32 %s160, 1
      %p164 = scmp.eq.s32.totalorder %s21, 1
      %p165 = scmp.ne.s32.totalorder %s160, %s162
      %p166 = scmp.eq.s32.totalorder %s21, 0
      %p167 = por %p165, %p166
      %p168 = scmp.ne.s32.totalorder %s160, %s162
      %p169 = scmp.eq.s32.totalorder %s26, 1
      %p170 = por %p168, %p169
      %p171 = scmp.ne.s32.totalorder %s162, %s163
      %p172 = scmp.eq.s32.totalorder %s26, 0
      %p173 = por %p171, %p172
      %p174 = scmp.ne.s32.totalorder %s162, %s163
      %p175 = scmp.eq.s32.totalorder %s27, 1
      %p176 = por %p174, %p175
      %p178 = scmp.ne.s32.totalorder %s163, %s177
      %p179 = scmp.eq.s32.totalorder %s27, 0
      %p180 = por %p178, %p179
      %s181 = ssub.s32 %s21, %s28
      %p182 = scmp.eq.s32.totalorder %s181, 0
      %s184 = sadd.s32 %s183, 1
      %s185 = scalar_select %p182, %s183, %s184
      %p188 = pneg %p182
      %p189 = scmp.eq.s32.totalorder %s21, 1
      %p190 = por %p188, %p189
      %p191 = scmp.ne.s32.totalorder %s183, %s186
      %p192 = scmp.eq.s32.totalorder %s21, 0
      %p193 = por %p191, %p192
      %p194 = scmp.ne.s32.totalorder %s183, %s186
      %p195 = scmp.eq.s32.totalorder %s26, 1
      %p196 = por %p194, %p195
      %p197 = scmp.ne.s32.totalorder %s186, %s187
      %p198 = scmp.eq.s32.totalorder %s26, 0
      %p199 = por %p197, %p198
      %p200 = scmp.ne.s32.totalorder %s186, %s187
      %p201 = scmp.eq.s32.totalorder %s27, 1
      %p202 = por %p200, %p201
      %p204 = scmp.ne.s32.totalorder %s187, %s203
      %p205 = scmp.eq.s32.totalorder %s27, 0
      %p206 = por %p204, %p205
      %p207 = scmp.le.s32.totalorder 1, %s21
      %p208 = scmp.lt.s32.totalorder %s21, 3
      %p209 = pnand %p207, %p208
      %p210 = pneg %p209
      // Predicated region
      $region9: #{tpu_custom_call.1} parent=5 // pred_check
        _
      $region10: #{tpu_custom_call.1} parent=5 // pred_check_branch
        %212 = sbr.rel (%p209) target = $region12
      $region11: #{tpu_custom_call.1} parent=5 // pred_region
        %s213 = ssub.s32 %s21, 1
        // Predicated region
        $region13: #{tpu_custom_call.1} parent=11 // pred_check
          %p214 = pneg %p68
        $region14: #{tpu_custom_call.1} parent=11 // pred_check_branch
          %216 = sbr.rel (%p214) target = $region16
        $region15: #{tpu_custom_call.1} parent=11 // pred_region
          %218 = vsyncadd [#allocation6], 0
          %s219 = sshll.u32 %s1, 4
          %s220 = int_to_ptr.hbm [resolvable:$true] %s219
          %s221 = sshll.u32 [#allocation5], 4
          %s222 = int_to_ptr.vmem [resolvable:$true] %s221
          %227 = dma.hbm_to_vmem [thread:$0]  %s220, 512, %s222, [#allocation6], 128, 128, 8
        $region16: #{tpu_custom_call.1} parent=11 // pred_fallthru
          _
        // Predicated region
        $region17: #{tpu_custom_call.1} parent=11 // pred_check
          %p228 = pneg %p89
        $region18: #{tpu_custom_call.1} parent=11 // pred_check_branch
          %230 = sbr.rel (%p228) target = $region20
        $region19: #{tpu_custom_call.1} parent=11 // pred_region
          _
        $region20: #{tpu_custom_call.1} parent=11 // pred_fallthru
          _
        // Predicated region
        $region21: #{tpu_custom_call.1} parent=11 // pred_check
          %p231 = pneg %p110
        $region22: #{tpu_custom_call.1} parent=11 // pred_check_branch
          %233 = sbr.rel (%p231) target = $region24
        $region23: #{tpu_custom_call.1} parent=11 // pred_region
          %235 = vsyncadd [#allocation6], 0
          %s236 = sshll.u32 %s3, 4
          %s237 = int_to_ptr.hbm [resolvable:$true] %s236
          %s238 = sshll.u32 [#allocation7], 4
          %s239 = int_to_ptr.vmem [resolvable:$true] %s238
          %244 = dma.hbm_to_vmem [thread:$0]  %s237, 2048, %s239, [#allocation6], 128, 128, 8
        $region24: #{tpu_custom_call.1} parent=11 // pred_fallthru
          _
        // Predicated region
        $region25: #{tpu_custom_call.1} parent=11 // pred_check
          %p245 = pneg %p131
        $region26: #{tpu_custom_call.1} parent=11 // pred_check_branch
          %247 = sbr.rel (%p245) target = $region28
        $region27: #{tpu_custom_call.1} parent=11 // pred_region
          _
        $region28: #{tpu_custom_call.1} parent=11 // pred_fallthru
          _
        // Predicated region
        $region29: #{tpu_custom_call.1} parent=11 // pred_check
          %p248 = pneg %p152
        $region30: #{tpu_custom_call.1} parent=11 // pred_check_branch
          %250 = sbr.rel (%p248) target = $region32
        $region31: #{tpu_custom_call.1} parent=11 // pred_region
          %252 = vsyncadd [#allocation9], 0
          %s253 = sshll.u32 %s5, 4
          %s254 = int_to_ptr.hbm [resolvable:$true] %s253
          %s255 = sshll.u32 [#allocation8], 4
          %s256 = int_to_ptr.vmem [resolvable:$true] %s255
          %261 = dma.hbm_to_vmem [thread:$0]  %s254, 2048, %s256, [#allocation9], 128, 128, 8
        $region32: #{tpu_custom_call.1} parent=11 // pred_fallthru
          _
        // Predicated region
        $region33: #{tpu_custom_call.1} parent=11 // pred_check
          %p262 = pneg %p173
        $region34: #{tpu_custom_call.1} parent=11 // pred_check_branch
          %264 = sbr.rel (%p262) target = $region36
        $region35: #{tpu_custom_call.1} parent=11 // pred_region
          _
        $region36: #{tpu_custom_call.1} parent=11 // pred_fallthru
          _
      $region12: #{tpu_custom_call.1} parent=5 // pred_fallthru
        _
      %p265 = scmp.lt.s32.totalorder %s21, 2
      // Predicated region
      $region37: #{tpu_custom_call.1} parent=5 // pred_check
        %p266 = pneg %p265
      $region38: #{tpu_custom_call.1} parent=5 // pred_check_branch
        %268 = sbr.rel (%p266) target = $region40
      $region39: #{tpu_custom_call.1} parent=5 // pred_region
        // Predicated region
        $region41: #{tpu_custom_call.1} parent=39 // pred_check
          %p269 = pneg %p41
        $region42: #{tpu_custom_call.1} parent=39 // pred_check_branch
          %271 = sbr.rel (%p269) target = $region44
        $region43: #{tpu_custom_call.1} parent=39 // pred_region
          %s272 = sand.u32 %s31, 1
          %s273 = scalar_lea.sflag [#allocation3], %s272
          %s274 = sand.u32 %s31, 1
          %s275 = smul.addr %s274, 8
          %s276 = scalar_lea.vmem [#allocation2], %s275
          %278 = vsyncadd %s273, 0
          %s279 = smul.addr %s21, 8
          %s280 = scalar_lea.hbm %s0, %s279
          %s282 = sshll.u32 %s280, 4
          %s283 = int_to_ptr.hbm [resolvable:$true] %s282
          %s284 = sshll.u32 %s276, 4
          %s285 = int_to_ptr.vmem [resolvable:$true] %s284
          %287 = dma.hbm_to_vmem [thread:$0]  %s283, 128, %s285, %s273
        $region44: #{tpu_custom_call.1} parent=39 // pred_fallthru
          _
      $region40: #{tpu_custom_call.1} parent=5 // pred_fallthru
        _
      %p288 = scmp.le.s32.totalorder 1, %s21
      %p289 = scmp.lt.s32.totalorder %s21, 3
      %p290 = pnand %p288, %p289
      %p291 = pneg %p290
      // Predicated region
      $region45: #{tpu_custom_call.1} parent=5 // pred_check
        _
      $region46: #{tpu_custom_call.1} parent=5 // pred_check_branch
        %293 = sbr.rel (%p290) target = $region48
      $region47: #{tpu_custom_call.1} parent=5 // pred_region
        %s294 = ssub.s32 %s21, 1
        %s295 = sand.u32 %s34, 1
        %s296 = scalar_lea.sflag [#allocation3], %s295
        %s297 = sand.u32 %s34, 1
        %s298 = smul.addr %s297, 8
        %s299 = scalar_lea.vmem [#allocation2], %s298
        // Predicated region
        $region49: #{tpu_custom_call.1} parent=47 // pred_check
          %p300 = pneg %p47
        $region50: #{tpu_custom_call.1} parent=47 // pred_check_branch
          %302 = sbr.rel (%p300) target = $region52
        $region51: #{tpu_custom_call.1} parent=47 // pred_region
          %304 = dma.done %s296, 128
        $region52: #{tpu_custom_call.1} parent=47 // pred_fallthru
          _
        // Predicated region
        $region53: #{tpu_custom_call.1} parent=47 // pred_check
          %p305 = pneg %p68
        $region54: #{tpu_custom_call.1} parent=47 // pred_check_branch
          %307 = sbr.rel (%p305) target = $region56
        $region55: #{tpu_custom_call.1} parent=47 // pred_region
          %309 = dma.done [#allocation6], 512
        $region56: #{tpu_custom_call.1} parent=47 // pred_fallthru
          _
        // Predicated region
        $region57: #{tpu_custom_call.1} parent=47 // pred_check
          %p310 = pneg %p110
        $region58: #{tpu_custom_call.1} parent=47 // pred_check_branch
          %312 = sbr.rel (%p310) target = $region60
        $region59: #{tpu_custom_call.1} parent=47 // pred_region
          %314 = dma.done [#allocation6], 2048
        $region60: #{tpu_custom_call.1} parent=47 // pred_fallthru
          _
        // Predicated region
        $region61: #{tpu_custom_call.1} parent=47 // pred_check
          %p315 = pneg %p152
        $region62: #{tpu_custom_call.1} parent=47 // pred_check_branch
          %317 = sbr.rel (%p315) target = $region64
        $region63: #{tpu_custom_call.1} parent=47 // pred_region
          %319 = dma.done [#allocation9], 2048
        $region64: #{tpu_custom_call.1} parent=47 // pred_fallthru
          _
        %s320 = sand.u32 %s34, 1
        %s321 = scalar_lea.sflag [#allocation3], %s320
        %s322 = sand.u32 %s34, 1
        %s323 = smul.addr %s322, 8
        %s324 = scalar_lea.vmem [#allocation2], %s323
        %p325 = pneg %p47
        %p326 = pneg %p44
        %p327 = pneg %p68
        %p328 = pneg %p65
        %p329 = pneg %p89
        %p330 = pneg %p86
        %p331 = pneg %p110
        %p332 = pneg %p107
        %p333 = pneg %p131
        %p334 = pneg %p128
        %p335 = pneg %p152
        %p336 = pneg %p149
        %p337 = pneg %p173
        %p338 = pneg %p170
        %p339 = pneg %p199
        %p340 = pneg %p196
        %s341 = sand.u32 %s186, 1
        %s342 = scalar_lea.sflag [#allocation4], %s341
        %s343 = sand.u32 %s186, 1
        %s344 = smul.addr %s343, 8
        %s345 = scalar_lea.vmem [#allocation10], %s344
        %v346 = vld [vmem:[%s299] sm:$0xff]
        %v347 = vld [vmem:[#allocation5] sm:$0xff]
        %v348 = vld [vmem:[#allocation5 + $0x8] sm:$0xff]
        %v349 = vld [vmem:[#allocation5 + $0x10] sm:$0xff]
        %v350 = vld [vmem:[#allocation5 + $0x18] sm:$0xff]
        %v351 = vld [vmem:[%s2] sm:$0x1]
        %v353 = vperm.slane %v351, 0
        %vm355 = vcmask 261120
        %v357 = vsel %vm355, %v346, 0
        %359 = vmatpush.msra.mxu0 0.0
        %360 = vmatpush.msra.mxu0 0.0
        %361 = vmatpush.msra.mxu0 0.0
        %362 = vmatpush.msra.mxu0 0.0
        %363 = vmatpush.msra.mxu0 0.0
        %364 = vmatpush.msra.mxu0 0.0
        %365 = vmatpush.msra.mxu0 0.0
        %366 = vmatpush.msra.mxu0 0.0
        %367 = vmatpush.msra.mxu0 0.0
        %368 = vmatpush.msra.mxu0 0.0
        %369 = vmatpush.msra.mxu0 0.0
        %370 = vmatpush.msra.mxu0 0.0
        %371 = vmatpush.msra.mxu0 %v350
        %372 = vmatpush.msra.mxu0 %v349
        %373 = vmatpush.msra.mxu0 %v348
        %374 = vmatpush.msra.mxu0 %v347
        %375 = vmatmul.f32.gmra.mxu0 %v357
        %v376 = vpop.f32.mrf.mxu0
        %v377 = vadd.f32 %v353, %v376
        %378 = vdwg.mxu0
        %v379 = vxor.u32 %v377, 2147483648
        %v380 = vmul.f32 %v379, 1.442695
        %v381 = vpow.pop %v380
        %v382 = vadd.f32 %v381, 1.0
        %v383 = vrcp.pop %v382
        %v384 = vmul.f32 %v382, %v383
        %v385 = vsub.f32 1.0, %v384
        %v386 = vmul.f32 %v383, %v385
        %v387 = vadd.f32 %v383, %v386
        %vm388 = vweird.f32 %v382
        %vm389 = vweird.f32 %v383
        %vm390 = vmor %vm388, %vm389
        %v391 = vsel %vm390, %v383, %v387
        %v392 = vand.u32 2147483647, %v382
        %vm393 = vcmp.eq.f32.partialorder %v392, 8.507059e+37
        %v394 = vand.u32 %v382, 2147483648
        %v395 = vor.u32 1.1754944e-38, %v394
        %v396 = vsel %vm393, %v395, %v391
        %v397 = vmul.f32 1.0, %v396
        %v398 = vld [vmem:[#allocation7] sm:$0xff]
        %v399 = vld [vmem:[#allocation7 + $0x8] sm:$0xff]
        %v400 = vld [vmem:[#allocation7 + $0x10] sm:$0xff]
        %v401 = vld [vmem:[#allocation7 + $0x18] sm:$0xff]
        %v402 = vld [vmem:[#allocation7 + $0x20] sm:$0xff]
        %v403 = vld [vmem:[#allocation7 + $0x28] sm:$0xff]
        %v404 = vld [vmem:[#allocation7 + $0x30] sm:$0xff]
        %v405 = vld [vmem:[#allocation7 + $0x38] sm:$0xff]
        %v406 = vld [vmem:[#allocation7 + $0x40] sm:$0xff]
        %v407 = vld [vmem:[#allocation7 + $0x48] sm:$0xff]
        %v408 = vld [vmem:[#allocation7 + $0x50] sm:$0xff]
        %v409 = vld [vmem:[#allocation7 + $0x58] sm:$0xff]
        %v410 = vld [vmem:[#allocation7 + $0x60] sm:$0xff]
        %v411 = vld [vmem:[#allocation7 + $0x68] sm:$0xff]
        %v412 = vld [vmem:[#allocation7 + $0x70] sm:$0xff]
        %v413 = vld [vmem:[#allocation7 + $0x78] sm:$0xff]
        %v414 = vld [vmem:[%s4] sm:$0x1]
        %v416 = vperm.slane %v414, 0
        %418 = vmatpush.msra.mxu0 %v413
        %419 = vmatpush.msra.mxu0 %v412
        %420 = vmatpush.msra.mxu0 %v411
        %421 = vmatpush.msra.mxu0 %v410
        %422 = vmatpush.msra.mxu0 %v409
        %423 = vmatpush.msra.mxu0 %v408
        %424 = vmatpush.msra.mxu0 %v407
        %425 = vmatpush.msra.mxu0 %v406
        %426 = vmatpush.msra.mxu0 %v405
        %427 = vmatpush.msra.mxu0 %v404
        %428 = vmatpush.msra.mxu0 %v403
        %429 = vmatpush.msra.mxu0 %v402
        %430 = vmatpush.msra.mxu0 %v401
        %431 = vmatpush.msra.mxu0 %v400
        %432 = vmatpush.msra.mxu0 %v399
        %433 = vmatpush.msra.mxu0 %v398
        %434 = vmatmul.f32.gmra.mxu0 %v397
        %v435 = vpop.f32.mrf.mxu0
        %v436 = vadd.f32 %v416, %v435
        %437 = vdwg.mxu0
        %v438 = vxor.u32 %v436, 2147483648
        %v439 = vmul.f32 %v438, 1.442695
        %v440 = vpow.pop %v439
        %v441 = vadd.f32 %v440, 1.0
        %v442 = vrcp.pop %v441
        %v443 = vmul.f32 %v441, %v442
        %v444 = vsub.f32 1.0, %v443
        %v445 = vmul.f32 %v442, %v444
        %v446 = vadd.f32 %v442, %v445
        %vm447 = vweird.f32 %v441
        %vm448 = vweird.f32 %v442
        %vm449 = vmor %vm447, %vm448
        %v450 = vsel %vm449, %v442, %v446
        %v451 = vand.u32 2147483647, %v441
        %vm452 = vcmp.eq.f32.partialorder %v451, 8.507059e+37
        %v453 = vand.u32 %v441, 2147483648
        %v454 = vor.u32 1.1754944e-38, %v453
        %v455 = vsel %vm452, %v454, %v450
        %v456 = vmul.f32 1.0, %v455
        %v457 = vld [vmem:[#allocation8] sm:$0xff]
        %v458 = vld [vmem:[#allocation8 + $0x8] sm:$0xff]
        %v459 = vld [vmem:[#allocation8 + $0x10] sm:$0xff]
        %v460 = vld [vmem:[#allocation8 + $0x18] sm:$0xff]
        %v461 = vld [vmem:[#allocation8 + $0x20] sm:$0xff]
        %v462 = vld [vmem:[#allocation8 + $0x28] sm:$0xff]
        %v463 = vld [vmem:[#allocation8 + $0x30] sm:$0xff]
        %v464 = vld [vmem:[#allocation8 + $0x38] sm:$0xff]
        %v465 = vld [vmem:[#allocation8 + $0x40] sm:$0xff]
        %v466 = vld [vmem:[#allocation8 + $0x48] sm:$0xff]
        %v467 = vld [vmem:[#allocation8 + $0x50] sm:$0xff]
        %v468 = vld [vmem:[#allocation8 + $0x58] sm:$0xff]
        %v469 = vld [vmem:[#allocation8 + $0x60] sm:$0xff]
        %v470 = vld [vmem:[#allocation8 + $0x68] sm:$0xff]
        %v471 = vld [vmem:[#allocation8 + $0x70] sm:$0xff]
        %v472 = vld [vmem:[#allocation8 + $0x78] sm:$0xff]
        %v473 = vld [vmem:[%s6] sm:$0x1]
        %v475 = vperm.slane %v473, 0
        %477 = vmatpush.msra.mxu0 %v472
        %478 = vmatpush.msra.mxu0 %v471
        %479 = vmatpush.msra.mxu0 %v470
        %480 = vmatpush.msra.mxu0 %v469
        %481 = vmatpush.msra.mxu0 %v468
        %482 = vmatpush.msra.mxu0 %v467
        %483 = vmatpush.msra.mxu0 %v466
        %484 = vmatpush.msra.mxu0 %v465
        %485 = vmatpush.msra.mxu0 %v464
        %486 = vmatpush.msra.mxu0 %v463
        %487 = vmatpush.msra.mxu0 %v462
        %488 = vmatpush.msra.mxu0 %v461
        %489 = vmatpush.msra.mxu0 %v460
        %490 = vmatpush.msra.mxu0 %v459
        %491 = vmatpush.msra.mxu0 %v458
        %492 = vmatpush.msra.mxu0 %v457
        %493 = vmatmul.f32.gmra.mxu0 %v456
        %v494 = vpop.f32.mrf.mxu0
        %v495 = vadd.f32 %v475, %v494
        %496 = vdwg.mxu0
        %497 = vst [vmem:[%s345] sm:$0xff] %v495
        %s498 = sand.u32 %s186, 1
        %s499 = scalar_lea.sflag [#allocation4], %s498
        %s500 = sand.u32 %s186, 1
        %s501 = smul.addr %s500, 8
        %s502 = scalar_lea.vmem [#allocation10], %s501
        // Predicated region
        $region65: #{tpu_custom_call.1} parent=47 // pred_check
          %p503 = pneg %p196
        $region66: #{tpu_custom_call.1} parent=47 // pred_check_branch
          %505 = sbr.rel (%p503) target = $region68
        $region67: #{tpu_custom_call.1} parent=47 // pred_region
          %507 = vsyncadd %s499, 0
          %s508 = smul.addr %s26, 8
          %s509 = scalar_lea.hbm %s7, %s508
          %s511 = sshll.u32 %s502, 4
          %s512 = int_to_ptr.vmem [resolvable:$true] %s511
          %s513 = sshll.u32 %s509, 4
          %s514 = int_to_ptr.hbm [resolvable:$true] %s513
          %516 = dma.vmem_to_hbm [thread:$0]  %s512, 128, %s514, %s499
        $region68: #{tpu_custom_call.1} parent=47 // pred_fallthru
          _
      $region48: #{tpu_custom_call.1} parent=5 // pred_fallthru
        _
      %p517 = scmp.le.s32.totalorder 2, %s21
      // Predicated region
      $region69: #{tpu_custom_call.1} parent=5 // pred_check
        %p518 = pneg %p517
      $region70: #{tpu_custom_call.1} parent=5 // pred_check_branch
        %520 = sbr.rel (%p518) target = $region72
      $region71: #{tpu_custom_call.1} parent=5 // pred_region
        %s521 = ssub.s32 %s21, 2
        // Predicated region
        $region73: #{tpu_custom_call.1} parent=71 // pred_check
          %p522 = pneg %p202
        $region74: #{tpu_custom_call.1} parent=71 // pred_check_branch
          %524 = sbr.rel (%p522) target = $region76
        $region75: #{tpu_custom_call.1} parent=71 // pred_region
          %s525 = sand.u32 %s187, 1
          %s526 = scalar_lea.sflag [#allocation4], %s525
          %s527 = sand.u32 %s187, 1
          %s528 = smul.addr %s527, 8
          %s529 = scalar_lea.vmem [#allocation10], %s528
          %531 = dma.done %s526, 128
        $region76: #{tpu_custom_call.1} parent=71 // pred_fallthru
          _
      $region72: #{tpu_custom_call.1} parent=5 // pred_fallthru
        _
    $region6: #{tpu_custom_call.1} parent=1 // loop_footer
      %s25 = sadd.s32 1, %s21
    $region7: #{tpu_custom_call.1} parent=1 // loop_footer_branch
      %20 = sbr.rel target = $region3
    $region8: #{tpu_custom_call.1} parent=1 // loop_exit
      _
    %532 = vsyncpa [#allocation3], 1
    %s533 = scalar_lea.sflag [#allocation3], 1
    %534 = vsyncpa %s533, 1
    %535 = vsyncpa [#allocation6], 1
    %536 = vsyncpa [#allocation9], 1
    %537 = vsyncpa [#allocation4], 1
    %s538 = scalar_lea.sflag [#allocation4], 1
    %539 = vsyncpa %s538, 1

</llo_original>
